<compile_context>
chip_gen: v6e
topology: v6e:2x2x1
jax: 0.10.0
libtpu: 0.0.40
codegen_flags: <defaults>
</compile_context>

<pallas_src>
import jax
import jax.numpy as jnp
from jax.experimental import pallas as pl
from jax.experimental.pallas import tpu as pltpu

BN_EPS = 1e-5
NEG_BIG = -1e30  # finite "minus infinity" for padded class columns (avoids NaN paths)


def _round_up(n, m):
    return ((n + m - 1) // m) * m


def _pointnet_head_kernel(
    x_ref,                 # (TB, 256)   batch tile
    w1_ref, b1_ref,        # (256, 128), (1, 128)   BN1 folded in
    w2_ref, b2_ref,        # (128, 64),  (1, 64)    BN2 folded in
    w3_ref, b3_ref,        # (64, C_pad), (1, C_pad)  padded class dim
    out_ref,               # (TB, C_pad) log-probabilities (padded cols are junk)
):
    x = x_ref[...]

    # ---- fc1 (+ folded bn1) + relu ----
    h1 = jnp.dot(x, w1_ref[...], preferred_element_type=jnp.float32) + b1_ref[...]
    h1 = jnp.maximum(h1, 0.0)

    # ---- fc2 (+ folded bn2) + relu ----
    h2 = jnp.dot(h1, w2_ref[...], preferred_element_type=jnp.float32) + b2_ref[...]
    h2 = jnp.maximum(h2, 0.0)

    # dropout: identity in eval mode (deterministic forward)
    # TODO(synk): training-mode dropout (random mask) intentionally not modeled.

    # ---- fc3 + stable log_softmax over the (padded) class lanes ----
    logits = jnp.dot(h2, w3_ref[...], preferred_element_type=jnp.float32) + b3_ref[...]
    m = jnp.max(logits, axis=-1, keepdims=True)
    shifted = logits - m
    lse = jnp.log(jnp.sum(jnp.exp(shifted), axis=-1, keepdims=True))
    out_ref[...] = shifted - lse


def classification_pointnet_forward(x, params, *, block_rows=512):
    """x: any shape whose total element count is divisible by 256 (view(-1, 256))."""
    x2d = x.reshape(-1, 256).astype(jnp.float32)
    B = x2d.shape[0]
    C = params["w3"].shape[1]
    C_pad = _round_up(max(C, 128), 128)

    # ---- fold BatchNorm (inference mode) into fc1/fc2 on the host ----
    s1 = params["g1"] * jax.lax.rsqrt(params["rv1"] + BN_EPS)          # (1, 128)
    w1f = params["w1"] * s1
    b1f = (params["b1"] - params["rm1"]) * s1 + params["be1"]
    s2 = params["g2"] * jax.lax.rsqrt(params["rv2"] + BN_EPS)          # (1, 64)
    w2f = params["w2"] * s2
    b2f = (params["b2"] - params["rm2"]) * s2 + params["be2"]

    # ---- pad the class dimension to a lane-dense multiple of 128 ----
    w3p = jnp.zeros((64, C_pad), jnp.float32).at[:, :C].set(params["w3"])
    b3p = jnp.full((1, C_pad), NEG_BIG, jnp.float32).at[:, :C].set(params["b3"])

    # ---- tile the flattened batch; pad rows so the grid divides evenly ----
    TB = min(block_rows, _round_up(B, 8))          # small inputs: single small tile
    Bp = _round_up(B, TB)
    if Bp != B:
        x2d = jnp.pad(x2d, ((0, Bp - B), (0, 0)))
    grid = (Bp // TB,)

    def batch_spec(shape):
        return pl.BlockSpec(shape, lambda i: (i, 0))

    def const_spec(shape):
        # Constant block index => DMA'd once, resident across all grid steps.
        return pl.BlockSpec(shape, lambda i: (0, 0))

    out_padded = pl.pallas_call(
        _pointnet_head_kernel,
        out_shape=jax.ShapeDtypeStruct((Bp, C_pad), jnp.float32),
        grid=grid,
        in_specs=[
            batch_spec((TB, 256)),
            const_spec((256, 128)), const_spec((1, 128)),
            const_spec((128, 64)), const_spec((1, 64)),
            const_spec((64, C_pad)), const_spec((1, C_pad)),
        ],
        out_specs=batch_spec((TB, C_pad)),
        compiler_params=pltpu.CompilerParams(
            dimension_semantics=("parallel",),
            vmem_limit_bytes=32 * 1024 * 1024,
        ),
    )(x2d, w1f, b1f, w2f, b2f, w3p, b3p)

    return out_padded[:B, :C]


def init_params(key, num_classes):
    """Deterministic synthetic parameters (shapes follow the PyTorch module)."""
    ks = jax.random.split(key, 6)

    def lin(kw, kb, fan_in, fan_out):
        bound = 1.0 / jnp.sqrt(fan_in)
        w = jax.random.uniform(kw, (fan_in, fan_out), jnp.float32, -bound, bound)
        b = jax.random.uniform(kb, (1, fan_out), jnp.float32, -bound, bound)
        return w, b

    w1, b1 = lin(ks[0], ks[1], 256, 128)
    w2, b2 = lin(ks[2], ks[3], 128, 64)
    w3, b3 = lin(ks[4], ks[5], 64, num_classes)

    params = dict(
        w1=w1, b1=b1,
        g1=jnp.ones((1, 128), jnp.float32), be1=jnp.zeros((1, 128), jnp.float32),
        rm1=jnp.zeros((1, 128), jnp.float32), rv1=jnp.ones((1, 128), jnp.float32),
        w2=w2, b2=b2,
        g2=jnp.ones((1, 64), jnp.float32), be2=jnp.zeros((1, 64), jnp.float32),
        rm2=jnp.zeros((1, 64), jnp.float32), rv2=jnp.ones((1, 64), jnp.float32),
        w3=w3, b3=b3,
    )
    return params


def reference_forward(x, params):
    """Pure-JAX reference (un-folded BN) for a sanity check."""
    x = x.reshape(-1, 256).astype(jnp.float32)
    h1 = x @ params["w1"] + params["b1"]
    h1 = (h1 - params["rm1"]) * jax.lax.rsqrt(params["rv1"] + BN_EPS) * params["g1"] + params["be1"]
    h1 = jnp.maximum(h1, 0.0)
    h2 = h1 @ params["w2"] + params["b2"]
    h2 = (h2 - params["rm2"]) * jax.lax.rsqrt(params["rv2"] + BN_EPS) * params["g2"] + params["be2"]
    h2 = jnp.maximum(h2, 0.0)
    logits = h2 @ params["w3"] + params["b3"]
    return jax.nn.log_softmax(logits, axis=1)


if __name__ == "__main__":
    num_classes = 10
    key = jax.random.PRNGKey(0)
    k_param, k_x = jax.random.split(key)

    params = init_params(k_param, num_classes)

    # Example input: (2, 4, 16, 16) -> view(-1, 256) -> (8, 256)
    x = jax.random.normal(k_x, (2, 4, 16, 16), jnp.float32)

    out = classification_pointnet_forward(x, params)
    out = jax.block_until_ready(out)

    ref = reference_forward(x, params)
    assert out.shape == (8, num_classes)
    assert jnp.allclose(out, ref, atol=1e-5, rtol=1e-5), "mismatch vs reference"
    # log_softmax rows should sum (in prob space) to 1
    assert jnp.allclose(jnp.sum(jnp.exp(out), axis=1), 1.0, atol=1e-5)

    print("KERNEL_OK")
</pallas_src>

<mosaic_0001>
module attributes {stable_mosaic.version = 11 : i64} {
  func.func @_pointnet_head_kernel(%arg0: i32, %arg1: memref<8x256xf32, #tpu.memory_space<vmem>>, %arg2: memref<256x128xf32, #tpu.memory_space<vmem>>, %arg3: memref<1x128xf32, #tpu.memory_space<vmem>>, %arg4: memref<128x64xf32, #tpu.memory_space<vmem>>, %arg5: memref<1x64xf32, #tpu.memory_space<vmem>>, %arg6: memref<64x128xf32, #tpu.memory_space<vmem>>, %arg7: memref<1x128xf32, #tpu.memory_space<vmem>>, %arg8: memref<8x128xf32, #tpu.memory_space<vmem>>) attributes {dimension_semantics = [#tpu.dimension_semantics<parallel>], iteration_bounds = array<i64: 1>, scalar_prefetch = 0 : i64, scratch_operands = 0 : i64, tpu.core_type = #tpu.core_type<tc>, window_params = [{transform_indices = @transform_0, window_bounds = array<i64: 8, 256>}, {pipeline_mode = #tpu.pipeline_mode<synchronous>, transform_indices = @transform_1, window_bounds = array<i64: 256, 128>}, {pipeline_mode = #tpu.pipeline_mode<synchronous>, transform_indices = @transform_2, window_bounds = array<i64: 1, 128>}, {pipeline_mode = #tpu.pipeline_mode<synchronous>, transform_indices = @transform_3, window_bounds = array<i64: 128, 64>}, {pipeline_mode = #tpu.pipeline_mode<synchronous>, transform_indices = @transform_4, window_bounds = array<i64: 1, 64>}, {pipeline_mode = #tpu.pipeline_mode<synchronous>, transform_indices = @transform_5, window_bounds = array<i64: 64, 128>}, {pipeline_mode = #tpu.pipeline_mode<synchronous>, transform_indices = @transform_6, window_bounds = array<i64: 1, 128>}, {transform_indices = @transform_7, window_bounds = array<i64: 8, 128>}]} {
    %c0 = arith.constant 0 : index
    %c0_0 = arith.constant 0 : index
    %0 = vector.load %arg1[%c0, %c0_0] : memref<8x256xf32, #tpu.memory_space<vmem>>, vector<8x256xf32>
    %c0_1 = arith.constant 0 : index
    %c0_2 = arith.constant 0 : index
    %1 = vector.load %arg2[%c0_1, %c0_2] : memref<256x128xf32, #tpu.memory_space<vmem>>, vector<256x128xf32>
    %cst = arith.constant dense<0.000000e+00> : vector<8x128xf32>
    %2 = tpu.matmul %0, %1, %cst {dimension_numbers = #tpu.dot_dimension_numbers<[1], [0], [0], [1], [0, 0, 1, 1], [], []>} : vector<8x256xf32>, vector<256x128xf32>, vector<8x128xf32> -> vector<8x128xf32>
    %c0_3 = arith.constant 0 : index
    %c0_4 = arith.constant 0 : index
    %3 = vector.load %arg3[%c0_3, %c0_4] : memref<1x128xf32, #tpu.memory_space<vmem>>, vector<1x128xf32>
    %4 = vector.broadcast %3 : vector<1x128xf32> to vector<8x128xf32>
    %5 = arith.addf %2, %4 : vector<8x128xf32>
    %cst_5 = arith.constant 0.000000e+00 : f32
    %6 = vector.broadcast %cst_5 : f32 to vector<8x128xf32>
    %7 = arith.maximumf %5, %6 : vector<8x128xf32>
    %c0_6 = arith.constant 0 : index
    %c0_7 = arith.constant 0 : index
    %8 = vector.load %arg4[%c0_6, %c0_7] : memref<128x64xf32, #tpu.memory_space<vmem>>, vector<128x64xf32>
    %cst_8 = arith.constant dense<0.000000e+00> : vector<8x64xf32>
    %9 = tpu.matmul %7, %8, %cst_8 {dimension_numbers = #tpu.dot_dimension_numbers<[1], [0], [0], [1], [0, 0, 1, 1], [], []>} : vector<8x128xf32>, vector<128x64xf32>, vector<8x64xf32> -> vector<8x64xf32>
    %c0_9 = arith.constant 0 : index
    %c0_10 = arith.constant 0 : index
    %10 = vector.load %arg5[%c0_9, %c0_10] : memref<1x64xf32, #tpu.memory_space<vmem>>, vector<1x64xf32>
    %11 = vector.broadcast %10 : vector<1x64xf32> to vector<8x64xf32>
    %12 = arith.addf %9, %11 : vector<8x64xf32>
    %cst_11 = arith.constant 0.000000e+00 : f32
    %13 = vector.broadcast %cst_11 : f32 to vector<8x64xf32>
    %14 = arith.maximumf %12, %13 : vector<8x64xf32>
    %c0_12 = arith.constant 0 : index
    %c0_13 = arith.constant 0 : index
    %15 = vector.load %arg6[%c0_12, %c0_13] : memref<64x128xf32, #tpu.memory_space<vmem>>, vector<64x128xf32>
    %cst_14 = arith.constant dense<0.000000e+00> : vector<8x128xf32>
    %16 = tpu.matmul %14, %15, %cst_14 {dimension_numbers = #tpu.dot_dimension_numbers<[1], [0], [0], [1], [0, 0, 1, 1], [], []>} : vector<8x64xf32>, vector<64x128xf32>, vector<8x128xf32> -> vector<8x128xf32>
    %c0_15 = arith.constant 0 : index
    %c0_16 = arith.constant 0 : index
    %17 = vector.load %arg7[%c0_15, %c0_16] : memref<1x128xf32, #tpu.memory_space<vmem>>, vector<1x128xf32>
    %18 = vector.broadcast %17 : vector<1x128xf32> to vector<8x128xf32>
    %19 = arith.addf %16, %18 : vector<8x128xf32>
    %cst_17 = arith.constant dense<0xFF800000> : vector<8xf32>
    %20 = vector.multi_reduction <maximumf>, %19, %cst_17 [1] : vector<8x128xf32> to vector<8xf32>
    %21 = vector.shape_cast %20 : vector<8xf32> to vector<8x1xf32>
    %22 = vector.broadcast %21 : vector<8x1xf32> to vector<8x128xf32>
    %23 = arith.subf %19, %22 : vector<8x128xf32>
    %24 = math.exp %23 : vector<8x128xf32>
    %cst_18 = arith.constant dense<0.000000e+00> : vector<8xf32>
    %25 = vector.multi_reduction <add>, %24, %cst_18 [1] : vector<8x128xf32> to vector<8xf32>
    %26 = vector.shape_cast %25 : vector<8xf32> to vector<8x1xf32>
    %27 = math.log %26 : vector<8x1xf32>
    %28 = vector.broadcast %27 : vector<8x1xf32> to vector<8x128xf32>
    %29 = arith.subf %23, %28 : vector<8x128xf32>
    %c0_19 = arith.constant 0 : index
    %c0_20 = arith.constant 0 : index
    %30 = vector.load %arg8[%c0_19, %c0_20] : memref<8x128xf32, #tpu.memory_space<vmem>>, vector<8x128xf32>
    tpu.vector_store %arg8[%c0_19, %c0_20], %29 {strides = array<i32>} : memref<8x128xf32, #tpu.memory_space<vmem>>, vector<8x128xf32>,
    return
  }
  func.func @transform_0(%arg0: i32) -> (i32, i32) {
    %c0_i32 = arith.constant 0 : i32
    %c0_i32_0 = arith.constant 0 : i32
    return %arg0, %c0_i32 : i32, i32
  }
  func.func @transform_1(%arg0: i32) -> (i32, i32) {
    %c0_i32 = arith.constant 0 : i32
    %c0_i32_0 = arith.constant 0 : i32
    %c0_i32_1 = arith.constant 0 : i32
    return %c0_i32, %c0_i32_0 : i32, i32
  }
  func.func @transform_2(%arg0: i32) -> (i32, i32) {
    %c0_i32 = arith.constant 0 : i32
    %c0_i32_0 = arith.constant 0 : i32
    %c0_i32_1 = arith.constant 0 : i32
    return %c0_i32, %c0_i32_0 : i32, i32
  }
  func.func @transform_3(%arg0: i32) -> (i32, i32) {
    %c0_i32 = arith.constant 0 : i32
    %c0_i32_0 = arith.constant 0 : i32
    %c0_i32_1 = arith.constant 0 : i32
    return %c0_i32, %c0_i32_0 : i32, i32
  }
  func.func @transform_4(%arg0: i32) -> (i32, i32) {
    %c0_i32 = arith.constant 0 : i32
    %c0_i32_0 = arith.constant 0 : i32
    %c0_i32_1 = arith.constant 0 : i32
    return %c0_i32, %c0_i32_0 : i32, i32
  }
  func.func @transform_5(%arg0: i32) -> (i32, i32) {
    %c0_i32 = arith.constant 0 : i32
    %c0_i32_0 = arith.constant 0 : i32
    %c0_i32_1 = arith.constant 0 : i32
    return %c0_i32, %c0_i32_0 : i32, i32
  }
  func.func @transform_6(%arg0: i32) -> (i32, i32) {
    %c0_i32 = arith.constant 0 : i32
    %c0_i32_0 = arith.constant 0 : i32
    %c0_i32_1 = arith.constant 0 : i32
    return %c0_i32, %c0_i32_0 : i32, i32
  }
  func.func @transform_7(%arg0: i32) -> (i32, i32) {
    %c0_i32 = arith.constant 0 : i32
    %c0_i32_0 = arith.constant 0 : i32
    return %arg0, %c0_i32 : i32, i32
  }
}

</mosaic_0001>

<llo_original>
// kernel: tpu_custom_call.1
$region0: #{tpu_custom_call.1}
  #allocation0 [shape = 'u32[]', space=smem, size = 0x4, offset = 0x4, fixed_abs, tag = 'smem constant byte address 0x4 - core index']
  #allocation1 [shape = 'u32[144,128]{1,0:T(1,128)}', space=vmem, size = 0x12000, scoped, tag = 'internal scratch']
  %s0 = inlined_call_operand.vmem [shape: f32[8,256], index: 0, kind: input, shape index: {}]
  %s1 = inlined_call_operand.hbm [shape: f32[256,128], index: 1, kind: input, shape index: {}]
  %s2 = inlined_call_operand.vmem [shape: f32[1,128], index: 2, kind: input, shape index: {}]
  %s3 = inlined_call_operand.vmem [shape: f32[128,64], index: 3, kind: input, shape index: {}]
  %s4 = inlined_call_operand.vmem [shape: f32[1,64], index: 4, kind: input, shape index: {}]
  %s5 = inlined_call_operand.vmem [shape: f32[64,128], index: 5, kind: input, shape index: {}]
  %s6 = inlined_call_operand.vmem [shape: f32[1,128], index: 6, kind: input, shape index: {}]
  %s7 = inlined_call_operand.hbm [shape: f32[8,128], index: 7, kind: output, shape index: {}]
  %s8 = sld [smem:[#allocation0]]
  $region42: #{tpu_custom_call.1} parent=0
    _
  %s10 = ssub.s32 1, %s8
  %s11 = scalar_select 0, %s10, %s8
  $region1: #{tpu_custom_call.1} parent=0
    #allocation2 [shape = 'u8[131072]{0}', space=vmem, size = 0x20000, scoped, tag = 'input window, operand 1, single buffered']
    #allocation3 [shape = 's32[1]{0}', space=sflag, size = 0x4, scoped, tag = 'scoped memory for tpu_custom_call.1']
    #allocation4 [shape = 's32[1]{0}', space=sflag, size = 0x4, scoped, tag = 'scoped memory for tpu_custom_call.1']
    #allocation5 [shape = 'u8[4096]{0}', space=vmem, size = 0x1000, scoped, tag = 'output window, operand 0, single buffered']
    %12 = vsyncpa [#allocation3], 0
    %13 = vsyncpa [#allocation4], 0
    // Predicated region
    $region2: #{tpu_custom_call.1} parent=1 // pred_check
      _
    $region3: #{tpu_custom_call.1} parent=1 // pred_check_branch
      %15 = sbr.rel (0) target = $region5
    $region4: #{tpu_custom_call.1} parent=1 // pred_region
      _
    $region5: #{tpu_custom_call.1} parent=1 // pred_fallthru
      _
    // Predicated region
    $region6: #{tpu_custom_call.1} parent=1 // pred_check
      _
    $region7: #{tpu_custom_call.1} parent=1 // pred_check_branch
      %17 = sbr.rel (0) target = $region9
    $region8: #{tpu_custom_call.1} parent=1 // pred_region
      %s19 = ssub.s32 4096, 4096
      %20 = vsyncadd [#allocation3], %s19
      %s21 = sshll.u32 [#allocation2], 4
      %s22 = int_to_ptr.vmem [resolvable:$true] %s21
      %27 = dma.hbm_to_vmem [thread:$0]  %s1, 4096, %s22, [#allocation3], 128, 128, 8
    $region9: #{tpu_custom_call.1} parent=1 // pred_fallthru
      _
    // Predicated region
    $region10: #{tpu_custom_call.1} parent=1 // pred_check
      _
    $region11: #{tpu_custom_call.1} parent=1 // pred_check_branch
      %29 = sbr.rel (0) target = $region13
    $region12: #{tpu_custom_call.1} parent=1 // pred_region
      _
    $region13: #{tpu_custom_call.1} parent=1 // pred_fallthru
      _
    // Predicated region
    $region14: #{tpu_custom_call.1} parent=1 // pred_check
      _
    $region15: #{tpu_custom_call.1} parent=1 // pred_check_branch
      %31 = sbr.rel (0) target = $region17
    $region16: #{tpu_custom_call.1} parent=1 // pred_region
      _
    $region17: #{tpu_custom_call.1} parent=1 // pred_fallthru
      _
    // Predicated region
    $region18: #{tpu_custom_call.1} parent=1 // pred_check
      _
    $region19: #{tpu_custom_call.1} parent=1 // pred_check_branch
      %33 = sbr.rel (0) target = $region21
    $region20: #{tpu_custom_call.1} parent=1 // pred_region
      _
    $region21: #{tpu_custom_call.1} parent=1 // pred_fallthru
      _
    // Predicated region
    $region22: #{tpu_custom_call.1} parent=1 // pred_check
      _
    $region23: #{tpu_custom_call.1} parent=1 // pred_check_branch
      %35 = sbr.rel (0) target = $region25
    $region24: #{tpu_custom_call.1} parent=1 // pred_region
      _
    $region25: #{tpu_custom_call.1} parent=1 // pred_fallthru
      _
    // Predicated region
    $region26: #{tpu_custom_call.1} parent=1 // pred_check
      _
    $region27: #{tpu_custom_call.1} parent=1 // pred_check_branch
      %37 = sbr.rel (0) target = $region29
    $region28: #{tpu_custom_call.1} parent=1 // pred_region
      _
    $region29: #{tpu_custom_call.1} parent=1 // pred_fallthru
      _
    // Predicated region
    $region30: #{tpu_custom_call.1} parent=1 // pred_check
      _
    $region31: #{tpu_custom_call.1} parent=1 // pred_check_branch
      %39 = sbr.rel (0) target = $region33
    $region32: #{tpu_custom_call.1} parent=1 // pred_region
      %40 = dma.done [#allocation3], 4096
    $region33: #{tpu_custom_call.1} parent=1 // pred_fallthru
      _
    %v41 = vld [vmem:[%s0] sm:$0xff]
    %v42 = vld [vmem:[%s0 + $0x8] sm:$0xff]
    %v43 = vld [vmem:[#allocation2] sm:$0xff]
    %v44 = vld [vmem:[#allocation2 + $0x8] sm:$0xff]
    %v45 = vld [vmem:[#allocation2 + $0x10] sm:$0xff]
    %v46 = vld [vmem:[#allocation2 + $0x18] sm:$0xff]
    %v47 = vld [vmem:[#allocation2 + $0x20] sm:$0xff]
    %v48 = vld [vmem:[#allocation2 + $0x28] sm:$0xff]
    %v49 = vld [vmem:[#allocation2 + $0x30] sm:$0xff]
    %v50 = vld [vmem:[#allocation2 + $0x38] sm:$0xff]
    %v51 = vld [vmem:[#allocation2 + $0x40] sm:$0xff]
    %v52 = vld [vmem:[#allocation2 + $0x48] sm:$0xff]
    %v53 = vld [vmem:[#allocation2 + $0x50] sm:$0xff]
    %v54 = vld [vmem:[#allocation2 + $0x58] sm:$0xff]
    %v55 = vld [vmem:[#allocation2 + $0x60] sm:$0xff]
    %v56 = vld [vmem:[#allocation2 + $0x68] sm:$0xff]
    %v57 = vld [vmem:[#allocation2 + $0x70] sm:$0xff]
    %v58 = vld [vmem:[#allocation2 + $0x78] sm:$0xff]
    %v59 = vld [vmem:[#allocation2 + $0x80] sm:$0xff]
    %v60 = vld [vmem:[#allocation2 + $0x88] sm:$0xff]
    %v61 = vld [vmem:[#allocation2 + $0x90] sm:$0xff]
    %v62 = vld [vmem:[#allocation2 + $0x98] sm:$0xff]
    %v63 = vld [vmem:[#allocation2 + $0xa0] sm:$0xff]
    %v64 = vld [vmem:[#allocation2 + $0xa8] sm:$0xff]
    %v65 = vld [vmem:[#allocation2 + $0xb0] sm:$0xff]
    %v66 = vld [vmem:[#allocation2 + $0xb8] sm:$0xff]
    %v67 = vld [vmem:[#allocation2 + $0xc0] sm:$0xff]
    %v68 = vld [vmem:[#allocation2 + $0xc8] sm:$0xff]
    %v69 = vld [vmem:[#allocation2 + $0xd0] sm:$0xff]
    %v70 = vld [vmem:[#allocation2 + $0xd8] sm:$0xff]
    %v71 = vld [vmem:[#allocation2 + $0xe0] sm:$0xff]
    %v72 = vld [vmem:[#allocation2 + $0xe8] sm:$0xff]
    %v73 = vld [vmem:[#allocation2 + $0xf0] sm:$0xff]
    %v74 = vld [vmem:[#allocation2 + $0xf8] sm:$0xff]
    %v75 = vld [vmem:[%s2] sm:$0x1]
    %v77 = vlaneseq
    %v78 = vshrl.u32 %v77, 7
    %v79 = vsub.s32 0, %v78
    %v80 = vrot.slane %v75, %v79
    %82 = vmatprep.subr.mxu0 0.0
    %83 = vmatpush1.msra.mxu0 %v58
    %84 = vmatprep.subr.mxu0 0.0
    %85 = vmatpush1.msra.mxu0 %v57
    %86 = vmatprep.subr.mxu0 0.0
    %87 = vmatpush1.msra.mxu0 %v56
    %88 = vmatprep.subr.mxu0 0.0
    %89 = vmatpush1.msra.mxu0 %v55
    %90 = vmatprep.subr.mxu0 0.0
    %91 = vmatpush1.msra.mxu0 %v54
    %92 = vmatprep.subr.mxu0 0.0
    %93 = vmatpush1.msra.mxu0 %v53
    %94 = vmatprep.subr.mxu0 0.0
    %95 = vmatpush1.msra.mxu0 %v52
    %96 = vmatprep.subr.mxu0 0.0
    %97 = vmatpush1.msra.mxu0 %v51
    %98 = vmatprep.subr.mxu0 0.0
    %99 = vmatpush1.msra.mxu0 %v50
    %100 = vmatprep.subr.mxu0 0.0
    %101 = vmatpush1.msra.mxu0 %v49
    %102 = vmatprep.subr.mxu0 0.0
    %103 = vmatpush1.msra.mxu0 %v48
    %104 = vmatprep.subr.mxu0 0.0
    %105 = vmatpush1.msra.mxu0 %v47
    %106 = vmatprep.subr.mxu0 0.0
    %107 = vmatpush1.msra.mxu0 %v46
    %108 = vmatprep.subr.mxu0 0.0
    %109 = vmatpush1.msra.mxu0 %v45
    %110 = vmatprep.subr.mxu0 0.0
    %111 = vmatpush1.msra.mxu0 %v44
    %112 = vmatprep.subr.mxu0 0.0
    %113 = vmatpush1.msra.mxu0 %v43
    %114 = vmatprep.subr.mxu0 0.0
    %115 = vmatpush2.msra.mxu0 %v74
    %116 = vmatprep.subr.mxu0 0.0
    %117 = vmatpush2.msra.mxu0 %v73
    %118 = vmatprep.subr.mxu0 0.0
    %119 = vmatpush2.msra.mxu0 %v72
    %120 = vmatprep.subr.mxu0 0.0
    %121 = vmatpush2.msra.mxu0 %v71
    %122 = vmatprep.subr.mxu0 0.0
    %123 = vmatpush2.msra.mxu0 %v70
    %124 = vmatprep.subr.mxu0 0.0
    %125 = vmatpush2.msra.mxu0 %v69
    %126 = vmatprep.subr.mxu0 0.0
    %127 = vmatpush2.msra.mxu0 %v68
    %128 = vmatprep.subr.mxu0 0.0
    %129 = vmatpush2.msra.mxu0 %v67
    %130 = vmatprep.subr.mxu0 0.0
    %131 = vmatpush2.msra.mxu0 %v66
    %132 = vmatprep.subr.mxu0 0.0
    %133 = vmatpush2.msra.mxu0 %v65
    %134 = vmatprep.subr.mxu0 0.0
    %135 = vmatpush2.msra.mxu0 %v64
    %136 = vmatprep.subr.mxu0 0.0
    %137 = vmatpush2.msra.mxu0 %v63
    %138 = vmatprep.subr.mxu0 0.0
    %139 = vmatpush2.msra.mxu0 %v62
    %140 = vmatprep.subr.mxu0 0.0
    %141 = vmatpush2.msra.mxu0 %v61
    %142 = vmatprep.subr.mxu0 0.0
    %143 = vmatpush2.msra.mxu0 %v60
    %144 = vmatprep.subr.mxu0 0.0
    %145 = vmatpush2.msra.mxu0 %v59
    %146 = vmatprep.mubr.f32.mxu0 %v42
    %147 = vmatmul.mubr.f32.gmra.mxu0 %v41
    %v148 = vpop.f32.mrf.mxu0
    %v149 = vadd.f32 %v80, %v148
    %v150 = vpop.f32.mrf.mxu0
    %151 = vdwg.mxu0
    %v152 = vmax.f32 %v149, 0.0
    %v153 = vld [vmem:[%s3] sm:$0xff]
    %v154 = vld [vmem:[%s3 + $0x8] sm:$0xff]
    %v155 = vld [vmem:[%s3 + $0x10] sm:$0xff]
    %v156 = vld [vmem:[%s3 + $0x18] sm:$0xff]
    %v157 = vld [vmem:[%s3 + $0x20] sm:$0xff]
    %v158 = vld [vmem:[%s3 + $0x28] sm:$0xff]
    %v159 = vld [vmem:[%s3 + $0x30] sm:$0xff]
    %v160 = vld [vmem:[%s3 + $0x38] sm:$0xff]
    %v161 = vld [vmem:[%s3 + $0x40] sm:$0xff]
    %v162 = vld [vmem:[%s3 + $0x48] sm:$0xff]
    %v163 = vld [vmem:[%s3 + $0x50] sm:$0xff]
    %v164 = vld [vmem:[%s3 + $0x58] sm:$0xff]
    %v165 = vld [vmem:[%s3 + $0x60] sm:$0xff]
    %v166 = vld [vmem:[%s3 + $0x68] sm:$0xff]
    %v167 = vld [vmem:[%s3 + $0x70] sm:$0xff]
    %v168 = vld [vmem:[%s3 + $0x78] sm:$0xff]
    %v169 = vld [vmem:[%s4] sm:$0x1]
    %v171 = vlaneseq
    %v172 = vshrl.u32 %v171, 7
    %v173 = vsub.s32 0, %v172
    %v174 = vrot.slane %v169, %v173
    %176 = vmatprep.subr.mxu0 0.0
    %177 = vmatpush1.msra.mxu0 %v168
    %178 = vmatprep.subr.mxu0 0.0
    %179 = vmatpush1.msra.mxu0 %v167
    %180 = vmatprep.subr.mxu0 0.0
    %181 = vmatpush1.msra.mxu0 %v166
    %182 = vmatprep.subr.mxu0 0.0
    %183 = vmatpush1.msra.mxu0 %v165
    %184 = vmatprep.subr.mxu0 0.0
    %185 = vmatpush1.msra.mxu0 %v164
    %186 = vmatprep.subr.mxu0 0.0
    %187 = vmatpush1.msra.mxu0 %v163
    %188 = vmatprep.subr.mxu0 0.0
    %189 = vmatpush1.msra.mxu0 %v162
    %190 = vmatprep.subr.mxu0 0.0
    %191 = vmatpush1.msra.mxu0 %v161
    %192 = vmatprep.subr.mxu0 0.0
    %193 = vmatpush1.msra.mxu0 %v160
    %194 = vmatprep.subr.mxu0 0.0
    %195 = vmatpush1.msra.mxu0 %v159
    %196 = vmatprep.subr.mxu0 0.0
    %197 = vmatpush1.msra.mxu0 %v158
    %198 = vmatprep.subr.mxu0 0.0
    %199 = vmatpush1.msra.mxu0 %v157
    %200 = vmatprep.subr.mxu0 0.0
    %201 = vmatpush1.msra.mxu0 %v156
    %202 = vmatprep.subr.mxu0 0.0
    %203 = vmatpush1.msra.mxu0 %v155
    %204 = vmatprep.subr.mxu0 0.0
    %205 = vmatpush1.msra.mxu0 %v154
    %206 = vmatprep.subr.mxu0 0.0
    %207 = vmatpush1.msra.mxu0 %v153
    %208 = vmatprep.subr.mxu0 0.0
    %209 = vmatpush2.msra.mxu0 0.0
    %210 = vmatprep.subr.mxu0 0.0
    %211 = vmatpush2.msra.mxu0 0.0
    %212 = vmatprep.subr.mxu0 0.0
    %213 = vmatpush2.msra.mxu0 0.0
    %214 = vmatprep.subr.mxu0 0.0
    %215 = vmatpush2.msra.mxu0 0.0
    %216 = vmatprep.subr.mxu0 0.0
    %217 = vmatpush2.msra.mxu0 0.0
    %218 = vmatprep.subr.mxu0 0.0
    %219 = vmatpush2.msra.mxu0 0.0
    %220 = vmatprep.subr.mxu0 0.0
    %221 = vmatpush2.msra.mxu0 0.0
    %222 = vmatprep.subr.mxu0 0.0
    %223 = vmatpush2.msra.mxu0 0.0
    %224 = vmatprep.subr.mxu0 0.0
    %225 = vmatpush2.msra.mxu0 0.0
    %226 = vmatprep.subr.mxu0 0.0
    %227 = vmatpush2.msra.mxu0 0.0
    %228 = vmatprep.subr.mxu0 0.0
    %229 = vmatpush2.msra.mxu0 0.0
    %230 = vmatprep.subr.mxu0 0.0
    %231 = vmatpush2.msra.mxu0 0.0
    %232 = vmatprep.subr.mxu0 0.0
    %233 = vmatpush2.msra.mxu0 0.0
    %234 = vmatprep.subr.mxu0 0.0
    %235 = vmatpush2.msra.mxu0 0.0
    %236 = vmatprep.subr.mxu0 0.0
    %237 = vmatpush2.msra.mxu0 0.0
    %238 = vmatprep.subr.mxu0 0.0
    %239 = vmatpush2.msra.mxu0 0.0
    %240 = vmatprep.mubr.f32.mxu0 0.0
    %241 = vmatmul.mubr.f32.gmra.mxu0 %v152
    %v242 = vpop.f32.mrf.mxu0
    %v243 = vadd.f32 %v174, %v242
    %v244 = vpop.f32.mrf.mxu0
    %245 = vdwg.mxu0
    %v246 = vmax.f32 %v243, 0.0
    %v247 = vld [vmem:[%s5] sm:$0xff]
    %v248 = vld [vmem:[%s5 + $0x8] sm:$0xff]
    %v249 = vld [vmem:[%s5 + $0x10] sm:$0xff]
    %v250 = vld [vmem:[%s5 + $0x18] sm:$0xff]
    %v251 = vld [vmem:[%s5 + $0x20] sm:$0xff]
    %v252 = vld [vmem:[%s5 + $0x28] sm:$0xff]
    %v253 = vld [vmem:[%s5 + $0x30] sm:$0xff]
    %v254 = vld [vmem:[%s5 + $0x38] sm:$0xff]
    %v255 = vld [vmem:[%s6] sm:$0x1]
    %v257 = vlaneseq
    %v258 = vshrl.u32 %v257, 7
    %v259 = vsub.s32 0, %v258
    %v260 = vrot.slane %v255, %v259
    %vm262 = vcmask 523264
    %v264 = vsel %vm262, %v246, 0
    %266 = vmatprep.subr.mxu0 0.0
    %267 = vmatpush1.msra.mxu0 0.0
    %268 = vmatprep.subr.mxu0 0.0
    %269 = vmatpush1.msra.mxu0 0.0
    %270 = vmatprep.subr.mxu0 0.0
    %271 = vmatpush1.msra.mxu0 0.0
    %272 = vmatprep.subr.mxu0 0.0
    %273 = vmatpush1.msra.mxu0 0.0
    %274 = vmatprep.subr.mxu0 0.0
    %275 = vmatpush1.msra.mxu0 0.0
    %276 = vmatprep.subr.mxu0 0.0
    %277 = vmatpush1.msra.mxu0 0.0
    %278 = vmatprep.subr.mxu0 0.0
    %279 = vmatpush1.msra.mxu0 0.0
    %280 = vmatprep.subr.mxu0 0.0
    %281 = vmatpush1.msra.mxu0 0.0
    %282 = vmatprep.subr.mxu0 0.0
    %283 = vmatpush1.msra.mxu0 %v254
    %284 = vmatprep.subr.mxu0 0.0
    %285 = vmatpush1.msra.mxu0 %v253
    %286 = vmatprep.subr.mxu0 0.0
    %287 = vmatpush1.msra.mxu0 %v252
    %288 = vmatprep.subr.mxu0 0.0
    %289 = vmatpush1.msra.mxu0 %v251
    %290 = vmatprep.subr.mxu0 0.0
    %291 = vmatpush1.msra.mxu0 %v250
    %292 = vmatprep.subr.mxu0 0.0
    %293 = vmatpush1.msra.mxu0 %v249
    %294 = vmatprep.subr.mxu0 0.0
    %295 = vmatpush1.msra.mxu0 %v248
    %296 = vmatprep.subr.mxu0 0.0
    %297 = vmatpush1.msra.mxu0 %v247
    %298 = vmatprep.subr.mxu0 0.0
    %299 = vmatpush2.msra.mxu0 0.0
    %300 = vmatprep.subr.mxu0 0.0
    %301 = vmatpush2.msra.mxu0 0.0
    %302 = vmatprep.subr.mxu0 0.0
    %303 = vmatpush2.msra.mxu0 0.0
    %304 = vmatprep.subr.mxu0 0.0
    %305 = vmatpush2.msra.mxu0 0.0
    %306 = vmatprep.subr.mxu0 0.0
    %307 = vmatpush2.msra.mxu0 0.0
    %308 = vmatprep.subr.mxu0 0.0
    %309 = vmatpush2.msra.mxu0 0.0
    %310 = vmatprep.subr.mxu0 0.0
    %311 = vmatpush2.msra.mxu0 0.0
    %312 = vmatprep.subr.mxu0 0.0
    %313 = vmatpush2.msra.mxu0 0.0
    %314 = vmatprep.subr.mxu0 0.0
    %315 = vmatpush2.msra.mxu0 0.0
    %316 = vmatprep.subr.mxu0 0.0
    %317 = vmatpush2.msra.mxu0 0.0
    %318 = vmatprep.subr.mxu0 0.0
    %319 = vmatpush2.msra.mxu0 0.0
    %320 = vmatprep.subr.mxu0 0.0
    %321 = vmatpush2.msra.mxu0 0.0
    %322 = vmatprep.subr.mxu0 0.0
    %323 = vmatpush2.msra.mxu0 0.0
    %324 = vmatprep.subr.mxu0 0.0
    %325 = vmatpush2.msra.mxu0 0.0
    %326 = vmatprep.subr.mxu0 0.0
    %327 = vmatpush2.msra.mxu0 0.0
    %328 = vmatprep.subr.mxu0 0.0
    %329 = vmatpush2.msra.mxu0 0.0
    %330 = vmatprep.mubr.f32.mxu0 0.0
    %331 = vmatmul.mubr.f32.gmra.mxu0 %v264
    %v332 = vpop.f32.mrf.mxu0
    %v333 = vadd.f32 %v260, %v332
    %v334 = vpop.f32.mrf.mxu0
    %335 = vdwg.mxu0
    %336 = vmax.xlane.f32.xlu0 %v333
    %v337 = vpop.xlane.xlu0 %336
    %v338 = vsub.f32 %v333, %v337
    %v339 = vmul.f32 %v338, 1.442695
    %v340 = vpow.pop %v339
    %341 = vadd.xlane.f32.xlu0 %v340
    %v342 = vpop.xlane.xlu0 %341
    %v343 = vlog2.pop %v342
    %v344 = vmul.f32 %v343, 0.6931472
    %v345 = vsub.f32 %v338, %v344
    %346 = vst [vmem:[#allocation5] sm:$0xff] %v345
    // Predicated region
    $region34: #{tpu_custom_call.1} parent=1 // pred_check
      _
    $region35: #{tpu_custom_call.1} parent=1 // pred_check_branch
      %348 = sbr.rel (0) target = $region37
    $region36: #{tpu_custom_call.1} parent=1 // pred_region
      %s350 = ssub.s32 128, 128
      %351 = vsyncadd [#allocation4], %s350
      %s353 = sshll.u32 [#allocation5], 4
      %s354 = int_to_ptr.vmem [resolvable:$true] %s353
      %356 = dma.vmem_to_hbm [thread:$0]  %s354, 128, %s7, [#allocation4]
    $region37: #{tpu_custom_call.1} parent=1 // pred_fallthru
      _
    // Predicated region
    $region38: #{tpu_custom_call.1} parent=1 // pred_check
      _
    $region39: #{tpu_custom_call.1} parent=1 // pred_check_branch
      %358 = sbr.rel (0) target = $region41
    $region40: #{tpu_custom_call.1} parent=1 // pred_region
      %359 = dma.done [#allocation4], 128
    $region41: #{tpu_custom_call.1} parent=1 // pred_fallthru
      _
    %360 = vsyncpa [#allocation3], 1
    %361 = vsyncpa [#allocation4], 1

</llo_original>
